<compile_context>
chip_gen: v5e
topology: v5e:2x2
jax: 0.10.0
libtpu: 0.0.40
codegen_flags: <defaults>
</compile_context>

<pallas_src>
import jax
import jax.numpy as jnp
from jax.experimental import pallas as pl
from jax.experimental.pallas import tpu as pltpu

_NUM_LAYERS = 5
_LANE = 128
_SUBLANE = 8
_D_HID = 128  # all hidden / output widths (100, 75, 40, 16, action) pad to one lane tile


def _round_up(x, m):
    return ((x + m - 1) // m) * m


def _cdiv(a, b):
    return -(-a // b)


# ----------------------------------------------------------------------------
# Pallas kernel: full MLP hot path for one batch tile.
#   x_ref  : (TB, D_IN)           bf16  padded observation tile (lane-dense)
#   w0_ref : (D_IN, 128)          bf16  first-layer weight (zero-padded)
#   w_ref  : (4, 128, 128)        bf16  layers 1..4 weight slab (zero-padded)
#   b_ref  : (5, 1, 128)          f32   bias slab (zero-padded)
#   out_ref: (TB, 128)            f32   padded q-values
# ----------------------------------------------------------------------------
def _qnet_kernel(x_ref, w0_ref, w_ref, b_ref, out_ref):
    # Layer 0: bf16 x bf16 on the MXU, f32 accumulation.
    h = jnp.dot(x_ref[...], w0_ref[...], preferred_element_type=jnp.float32)
    h = jnp.maximum(h + b_ref[0], 0.0)
    # Layers 1..4, statically unrolled; f32 activations, bf16 MXU operands.
    for i in range(1, _NUM_LAYERS):
        acc = jnp.dot(h.astype(jnp.bfloat16), w_ref[i - 1],
                      preferred_element_type=jnp.float32)
        h = acc + b_ref[i]
        if i < _NUM_LAYERS - 1:
            h = jnp.maximum(h, 0.0)
    out_ref[...] = h


# ----------------------------------------------------------------------------
# One-time parameter packing (keep OUT of the per-step RL hot path).
# ----------------------------------------------------------------------------
def pack_qnetwork_params(params):
    """Pack the 5 (w, b) layers into padded bf16/f32 slabs.

    Returns a dict with:
      w0      : (d_in_pad, 128) bf16   first-layer weight
      w_rest  : (4, 128, 128)   bf16   remaining layers
      b       : (5, 1, 128)     f32    biases
      d_in_pad, obs_features, action_size : ints
    """
    assert len(params) == _NUM_LAYERS
    obs_features = int(params[0][0].shape[0])
    action_size = int(params[-1][0].shape[1])
    d_in_pad = _round_up(obs_features, _LANE)

    w0 = jnp.zeros((d_in_pad, _D_HID), jnp.float32)
    w_rest = jnp.zeros((_NUM_LAYERS - 1, _D_HID, _D_HID), jnp.float32)
    b_slab = jnp.zeros((_NUM_LAYERS, 1, _D_HID), jnp.float32)

    for i, (w, b) in enumerate(params):
        n_in, n_out = w.shape
        b2 = jnp.reshape(b, (1, n_out)).astype(jnp.float32)
        b_slab = b_slab.at[i, :1, :n_out].set(b2)
        if i == 0:
            w0 = w0.at[:n_in, :n_out].set(w.astype(jnp.float32))
        else:
            w_rest = w_rest.at[i - 1, :n_in, :n_out].set(w.astype(jnp.float32))

    return {
        "w0": w0.astype(jnp.bfloat16),
        "w_rest": w_rest.astype(jnp.bfloat16),
        "b": b_slab,
        "d_in_pad": d_in_pad,
        "obs_features": obs_features,
        "action_size": action_size,
    }


def _const_spec(shape, single_buffer):
    """BlockSpec for a grid-invariant operand (constant index_map)."""
    mode = pl.Buffered(1) if single_buffer else None
    if len(shape) == 2:
        return pl.BlockSpec(shape, lambda i: (0, 0), pipeline_mode=mode)
    return pl.BlockSpec(shape, lambda i: (0, 0, 0), pipeline_mode=mode)


def _run_qnet(x_pad, w0, w_rest, b_slab, tb, n_tiles, single_buffer):
    b_pad, d_in_pad = x_pad.shape

    slab_bufs = 1 if single_buffer else 2
    vmem_bytes = (
        2 * tb * d_in_pad * 2          # x tile, double-buffered, bf16
        + 2 * tb * _D_HID * 4          # out tile, double-buffered, f32
        + slab_bufs * (d_in_pad * _D_HID * 2
                       + (_NUM_LAYERS - 1) * _D_HID * _D_HID * 2
                       + _NUM_LAYERS * _D_HID * 4))
    vmem_limit = int(min(max(2 * vmem_bytes, 16 << 20), 48 << 20))

    flops = 2 * b_pad * (d_in_pad * _D_HID + (_NUM_LAYERS - 1) * _D_HID * _D_HID)
    bytes_accessed = (x_pad.size * 2 + w0.size * 2 + w_rest.size * 2
                      + b_slab.size * 4 + b_pad * _D_HID * 4)

    return pl.pallas_call(
        _qnet_kernel,
        out_shape=jax.ShapeDtypeStruct((b_pad, _D_HID), jnp.float32),
        grid_spec=pltpu.PrefetchScalarGridSpec(
            num_scalar_prefetch=0,
            grid=(n_tiles,),
            in_specs=[
                pl.BlockSpec((tb, d_in_pad), lambda i: (i, 0)),
                _const_spec((d_in_pad, _D_HID), single_buffer),
                _const_spec((_NUM_LAYERS - 1, _D_HID, _D_HID), single_buffer),
                _const_spec((_NUM_LAYERS, 1, _D_HID), single_buffer),
            ],
            out_specs=pl.BlockSpec((tb, _D_HID), lambda i: (i, 0)),
        ),
        compiler_params=pltpu.CompilerParams(
            dimension_semantics=("parallel",),
            vmem_limit_bytes=vmem_limit),
        cost_estimate=pl.CostEstimate(
            flops=flops, transcendentals=0, bytes_accessed=bytes_accessed),
    )(x_pad, w0, w_rest, b_slab)


# Resolved on the first forward call: True if pl.Buffered(1) (single-buffered
# constant slabs) lowers cleanly, else False (default double-buffering).
_SINGLE_BUFFER_SLABS = None


def qnetwork_forward(obs, packed):
    """Forward pass of QNetwork.

    Args:
      obs: (batch, *obs_size) float array (flattened like obs.view(B, -1)).
      packed: output of pack_qnetwork_params (built once per parameter set).

    Returns:
      q-values: (batch, action_size) float32.
    """
    global _SINGLE_BUFFER_SLABS

    batch = obs.shape[0]
    d_in_pad = packed["d_in_pad"]
    obs_features = packed["obs_features"]
    action_size = packed["action_size"]

    x = obs.reshape(batch, -1).astype(jnp.bfloat16)

    # Batch tiling: large tiles to amortize per-grid-step overhead, rebalanced
    # with cdiv so awkward batches don't pad up to 2x; >=2 tiles for large
    # batches so the "parallel" axis can shard across v7x's two TensorCores.
    tb = min(1024, _round_up(batch, _SUBLANE))
    n_tiles = _cdiv(batch, tb)
    if batch >= 512 and n_tiles < 2:
        n_tiles = 2
    tb = _round_up(_cdiv(batch, n_tiles), _SUBLANE)
    b_pad = n_tiles * tb

    x_pad = jnp.zeros((b_pad, d_in_pad), jnp.bfloat16)
    x_pad = x_pad.at[:batch, :obs_features].set(x)

    out_pad = None
    if _SINGLE_BUFFER_SLABS is None:
        # One-time probe of pipeline_mode=pl.Buffered(1); fall back if rejected.
        try:
            out_pad = jax.block_until_ready(
                _run_qnet(x_pad, packed["w0"], packed["w_rest"], packed["b"],
                          tb, n_tiles, single_buffer=True))
            _SINGLE_BUFFER_SLABS = True
        except Exception:
            _SINGLE_BUFFER_SLABS = False
    if out_pad is None:
        out_pad = _run_qnet(x_pad, packed["w0"], packed["w_rest"], packed["b"],
                            tb, n_tiles, single_buffer=_SINGLE_BUFFER_SLABS)

    return out_pad[:batch, :action_size]


# ----------------------------------------------------------------------------
# Deterministic parameter initialization (shapes from QNetwork.__init__).
# ----------------------------------------------------------------------------
def init_qnetwork_params(key, obs_features, action_size, hidden_size=100):
    layer_dims = [obs_features, hidden_size, 75, 40, 16, action_size]
    params = []
    for i in range(len(layer_dims) - 1):
        fan_in, fan_out = layer_dims[i], layer_dims[i + 1]
        key, kw, kb = jax.random.split(key, 3)
        bound = 1.0 / float(fan_in) ** 0.5  # PyTorch default init range
        w = jax.random.uniform(kw, (fan_in, fan_out), jnp.float32, -bound, bound)
        b = jax.random.uniform(kb, (1, fan_out), jnp.float32, -bound, bound)
        params.append((w, b))
    return params


def qnetwork_reference(obs, params, operand_dtype=jnp.float32):
    """Pure-JAX reference. operand_dtype=bf16 matches the kernel's quantization."""
    h = obs.reshape(obs.shape[0], -1).astype(jnp.float32)
    for i, (w, b) in enumerate(params):
        h = jnp.dot(h.astype(operand_dtype), w.astype(operand_dtype),
                    preferred_element_type=jnp.float32) + b.reshape(1, -1)
        if i < len(params) - 1:
            h = jnp.maximum(h, 0.0)
    return h


if __name__ == "__main__":
    key = jax.random.PRNGKey(0)

    # Small shapes consistent with the module: obs_size = (4, 16) -> 64 features.
    batch = 8
    obs_size = (4, 16)
    action_size = 4
    hidden_size = 100  # module default

    obs_features = 1
    for d in obs_size:
        obs_features *= d

    key, k_obs, k_params = jax.random.split(key, 3)
    obs = jax.random.normal(k_obs, (batch,) + obs_size, dtype=jnp.float32)
    params = init_qnetwork_params(k_params, obs_features, action_size, hidden_size)

    # Pack once (outside the hot path), then run the kernel.
    packed = pack_qnetwork_params(params)
    q = qnetwork_forward(obs, packed)
    q = jax.block_until_ready(q)
    assert q.shape == (batch, action_size)

    # Second call reuses the packed slabs (hot-path shape).
    q2 = jax.block_until_ready(qnetwork_forward(obs, packed))
    assert jnp.allclose(q, q2)

    # Tight check vs a reference using the same bf16 operand quantization.
    q_ref_bf16 = qnetwork_reference(obs, params, operand_dtype=jnp.bfloat16)
    assert jnp.allclose(q, q_ref_bf16, atol=1e-3, rtol=1e-3)

    # Loose sanity check vs the full-f32 PyTorch-equivalent reference.
    # (bf16 MXU operands are an intentional numerics choice.)
    q_ref_f32 = qnetwork_reference(obs, params, operand_dtype=jnp.float32)
    assert jnp.allclose(q, q_ref_f32, atol=5e-2, rtol=5e-2)

    print("KERNEL_OK")
</pallas_src>

<mosaic_0001>
module attributes {stable_mosaic.version = 11 : i64} {
  func.func @_qnet_kernel(%arg0: i32, %arg1: memref<8x128xbf16, #tpu.memory_space<vmem>>, %arg2: memref<128x128xbf16, #tpu.memory_space<vmem>>, %arg3: memref<4x128x128xbf16, #tpu.memory_space<vmem>>, %arg4: memref<5x1x128xf32, #tpu.memory_space<vmem>>, %arg5: memref<8x128xf32, #tpu.memory_space<vmem>>) attributes {dimension_semantics = [#tpu.dimension_semantics<parallel>], iteration_bounds = array<i64: 1>, scalar_prefetch = 0 : i64, scratch_operands = 0 : i64, tpu.core_type = #tpu.core_type<tc>, window_params = [{transform_indices = @transform_0, window_bounds = array<i64: 8, 128>}, {pipeline_mode = #tpu.pipeline_mode<synchronous>, transform_indices = @transform_1, window_bounds = array<i64: 128, 128>}, {pipeline_mode = #tpu.pipeline_mode<synchronous>, transform_indices = @transform_2, window_bounds = array<i64: 4, 128, 128>}, {pipeline_mode = #tpu.pipeline_mode<synchronous>, transform_indices = @transform_3, window_bounds = array<i64: 5, 1, 128>}, {transform_indices = @transform_4, window_bounds = array<i64: 8, 128>}]} {
    %c0 = arith.constant 0 : index
    %c0_0 = arith.constant 0 : index
    %0 = vector.load %arg1[%c0, %c0_0] : memref<8x128xbf16, #tpu.memory_space<vmem>>, vector<8x128xbf16>
    %c0_1 = arith.constant 0 : index
    %c0_2 = arith.constant 0 : index
    %1 = vector.load %arg2[%c0_1, %c0_2] : memref<128x128xbf16, #tpu.memory_space<vmem>>, vector<128x128xbf16>
    %cst = arith.constant dense<0.000000e+00> : vector<8x128xf32>
    %2 = tpu.matmul %0, %1, %cst {dimension_numbers = #tpu.dot_dimension_numbers<[1], [0], [0], [1], [0, 0, 1, 1], [], []>} : vector<8x128xbf16>, vector<128x128xbf16>, vector<8x128xf32> -> vector<8x128xf32>
    %c0_3 = arith.constant 0 : index
    %c0_4 = arith.constant 0 : index
    %c0_5 = arith.constant 0 : index
    %3 = vector.load %arg4[%c0_3, %c0_4, %c0_5] : memref<5x1x128xf32, #tpu.memory_space<vmem>>, vector<1x1x128xf32>
    %4 = vector.shape_cast %3 : vector<1x1x128xf32> to vector<1x128xf32>
    %5 = vector.broadcast %4 : vector<1x128xf32> to vector<8x128xf32>
    %6 = arith.addf %2, %5 : vector<8x128xf32>
    %cst_6 = arith.constant 0.000000e+00 : f32
    %7 = vector.broadcast %cst_6 : f32 to vector<8x128xf32>
    %8 = arith.maximumf %6, %7 : vector<8x128xf32>
    %9 = arith.truncf %8 : vector<8x128xf32> to vector<8x128xbf16>
    %c0_7 = arith.constant 0 : index
    %c0_8 = arith.constant 0 : index
    %c0_9 = arith.constant 0 : index
    %10 = vector.load %arg3[%c0_7, %c0_8, %c0_9] : memref<4x128x128xbf16, #tpu.memory_space<vmem>>, vector<1x128x128xbf16>
    %11 = vector.shape_cast %10 : vector<1x128x128xbf16> to vector<128x128xbf16>
    %cst_10 = arith.constant dense<0.000000e+00> : vector<8x128xf32>
    %12 = tpu.matmul %9, %11, %cst_10 {dimension_numbers = #tpu.dot_dimension_numbers<[1], [0], [0], [1], [0, 0, 1, 1], [], []>} : vector<8x128xbf16>, vector<128x128xbf16>, vector<8x128xf32> -> vector<8x128xf32>
    %c1 = arith.constant 1 : index
    %c0_11 = arith.constant 0 : index
    %c0_12 = arith.constant 0 : index
    %13 = vector.load %arg4[%c1, %c0_11, %c0_12] : memref<5x1x128xf32, #tpu.memory_space<vmem>>, vector<1x1x128xf32>
    %14 = vector.shape_cast %13 : vector<1x1x128xf32> to vector<1x128xf32>
    %15 = vector.broadcast %14 : vector<1x128xf32> to vector<8x128xf32>
    %16 = arith.addf %12, %15 : vector<8x128xf32>
    %cst_13 = arith.constant 0.000000e+00 : f32
    %17 = vector.broadcast %cst_13 : f32 to vector<8x128xf32>
    %18 = arith.maximumf %16, %17 : vector<8x128xf32>
    %19 = arith.truncf %18 : vector<8x128xf32> to vector<8x128xbf16>
    %c1_14 = arith.constant 1 : index
    %c0_15 = arith.constant 0 : index
    %c0_16 = arith.constant 0 : index
    %20 = vector.load %arg3[%c1_14, %c0_15, %c0_16] : memref<4x128x128xbf16, #tpu.memory_space<vmem>>, vector<1x128x128xbf16>
    %21 = vector.shape_cast %20 : vector<1x128x128xbf16> to vector<128x128xbf16>
    %cst_17 = arith.constant dense<0.000000e+00> : vector<8x128xf32>
    %22 = tpu.matmul %19, %21, %cst_17 {dimension_numbers = #tpu.dot_dimension_numbers<[1], [0], [0], [1], [0, 0, 1, 1], [], []>} : vector<8x128xbf16>, vector<128x128xbf16>, vector<8x128xf32> -> vector<8x128xf32>
    %c2 = arith.constant 2 : index
    %c0_18 = arith.constant 0 : index
    %c0_19 = arith.constant 0 : index
    %23 = vector.load %arg4[%c2, %c0_18, %c0_19] : memref<5x1x128xf32, #tpu.memory_space<vmem>>, vector<1x1x128xf32>
    %24 = vector.shape_cast %23 : vector<1x1x128xf32> to vector<1x128xf32>
    %25 = vector.broadcast %24 : vector<1x128xf32> to vector<8x128xf32>
    %26 = arith.addf %22, %25 : vector<8x128xf32>
    %cst_20 = arith.constant 0.000000e+00 : f32
    %27 = vector.broadcast %cst_20 : f32 to vector<8x128xf32>
    %28 = arith.maximumf %26, %27 : vector<8x128xf32>
    %29 = arith.truncf %28 : vector<8x128xf32> to vector<8x128xbf16>
    %c2_21 = arith.constant 2 : index
    %c0_22 = arith.constant 0 : index
    %c0_23 = arith.constant 0 : index
    %30 = vector.load %arg3[%c2_21, %c0_22, %c0_23] : memref<4x128x128xbf16, #tpu.memory_space<vmem>>, vector<1x128x128xbf16>
    %31 = vector.shape_cast %30 : vector<1x128x128xbf16> to vector<128x128xbf16>
    %cst_24 = arith.constant dense<0.000000e+00> : vector<8x128xf32>
    %32 = tpu.matmul %29, %31, %cst_24 {dimension_numbers = #tpu.dot_dimension_numbers<[1], [0], [0], [1], [0, 0, 1, 1], [], []>} : vector<8x128xbf16>, vector<128x128xbf16>, vector<8x128xf32> -> vector<8x128xf32>
    %c3 = arith.constant 3 : index
    %c0_25 = arith.constant 0 : index
    %c0_26 = arith.constant 0 : index
    %33 = vector.load %arg4[%c3, %c0_25, %c0_26] : memref<5x1x128xf32, #tpu.memory_space<vmem>>, vector<1x1x128xf32>
    %34 = vector.shape_cast %33 : vector<1x1x128xf32> to vector<1x128xf32>
    %35 = vector.broadcast %34 : vector<1x128xf32> to vector<8x128xf32>
    %36 = arith.addf %32, %35 : vector<8x128xf32>
    %cst_27 = arith.constant 0.000000e+00 : f32
    %37 = vector.broadcast %cst_27 : f32 to vector<8x128xf32>
    %38 = arith.maximumf %36, %37 : vector<8x128xf32>
    %39 = arith.truncf %38 : vector<8x128xf32> to vector<8x128xbf16>
    %c3_28 = arith.constant 3 : index
    %c0_29 = arith.constant 0 : index
    %c0_30 = arith.constant 0 : index
    %40 = vector.load %arg3[%c3_28, %c0_29, %c0_30] : memref<4x128x128xbf16, #tpu.memory_space<vmem>>, vector<1x128x128xbf16>
    %41 = vector.shape_cast %40 : vector<1x128x128xbf16> to vector<128x128xbf16>
    %cst_31 = arith.constant dense<0.000000e+00> : vector<8x128xf32>
    %42 = tpu.matmul %39, %41, %cst_31 {dimension_numbers = #tpu.dot_dimension_numbers<[1], [0], [0], [1], [0, 0, 1, 1], [], []>} : vector<8x128xbf16>, vector<128x128xbf16>, vector<8x128xf32> -> vector<8x128xf32>
    %c4 = arith.constant 4 : index
    %c0_32 = arith.constant 0 : index
    %c0_33 = arith.constant 0 : index
    %43 = vector.load %arg4[%c4, %c0_32, %c0_33] : memref<5x1x128xf32, #tpu.memory_space<vmem>>, vector<1x1x128xf32>
    %44 = vector.shape_cast %43 : vector<1x1x128xf32> to vector<1x128xf32>
    %45 = vector.broadcast %44 : vector<1x128xf32> to vector<8x128xf32>
    %46 = arith.addf %42, %45 : vector<8x128xf32>
    %c0_34 = arith.constant 0 : index
    %c0_35 = arith.constant 0 : index
    %47 = vector.load %arg5[%c0_34, %c0_35] : memref<8x128xf32, #tpu.memory_space<vmem>>, vector<8x128xf32>
    tpu.vector_store %arg5[%c0_34, %c0_35], %46 {strides = array<i32>} : memref<8x128xf32, #tpu.memory_space<vmem>>, vector<8x128xf32>,
    return
  }
  func.func @transform_0(%arg0: i32) -> (i32, i32) {
    %c0_i32 = arith.constant 0 : i32
    %c0_i32_0 = arith.constant 0 : i32
    return %arg0, %c0_i32 : i32, i32
  }
  func.func @transform_1(%arg0: i32) -> (i32, i32) {
    %c0_i32 = arith.constant 0 : i32
    %c0_i32_0 = arith.constant 0 : i32
    %c0_i32_1 = arith.constant 0 : i32
    return %c0_i32, %c0_i32_0 : i32, i32
  }
  func.func @transform_2(%arg0: i32) -> (i32, i32, i32) {
    %c0_i32 = arith.constant 0 : i32
    %c0_i32_0 = arith.constant 0 : i32
    %c0_i32_1 = arith.constant 0 : i32
    %c0_i32_2 = arith.constant 0 : i32
    return %c0_i32, %c0_i32_0, %c0_i32_1 : i32, i32, i32
  }
  func.func @transform_3(%arg0: i32) -> (i32, i32, i32) {
    %c0_i32 = arith.constant 0 : i32
    %c0_i32_0 = arith.constant 0 : i32
    %c0_i32_1 = arith.constant 0 : i32
    %c0_i32_2 = arith.constant 0 : i32
    return %c0_i32, %c0_i32_0, %c0_i32_1 : i32, i32, i32
  }
  func.func @transform_4(%arg0: i32) -> (i32, i32) {
    %c0_i32 = arith.constant 0 : i32
    %c0_i32_0 = arith.constant 0 : i32
    return %arg0, %c0_i32 : i32, i32
  }
}

module attributes {stable_mosaic.version = 11 : i64} {
  func.func @_qnet_kernel(%arg0: i32, %arg1: memref<8x128xbf16, #tpu.memory_space<vmem>>, %arg2: memref<128x128xbf16, #tpu.memory_space<vmem>>, %arg3: memref<4x128x128xbf16, #tpu.memory_space<vmem>>, %arg4: memref<5x1x128xf32, #tpu.memory_space<vmem>>, %arg5: memref<8x128xf32, #tpu.memory_space<vmem>>) attributes {dimension_semantics = [#tpu.dimension_semantics<parallel>], iteration_bounds = array<i64: 1>, scalar_prefetch = 0 : i64, scratch_operands = 0 : i64, tpu.core_type = #tpu.core_type<tc>, window_params = [{transform_indices = @transform_0, window_bounds = array<i64: 8, 128>}, {pipeline_mode = #tpu.pipeline_mode<synchronous>, transform_indices = @transform_1, window_bounds = array<i64: 128, 128>}, {pipeline_mode = #tpu.pipeline_mode<synchronous>, transform_indices = @transform_2, window_bounds = array<i64: 4, 128, 128>}, {pipeline_mode = #tpu.pipeline_mode<synchronous>, transform_indices = @transform_3, window_bounds = array<i64: 5, 1, 128>}, {transform_indices = @transform_4, window_bounds = array<i64: 8, 128>}]} {
    %c0 = arith.constant 0 : index
    %c0_0 = arith.constant 0 : index
    %0 = vector.load %arg1[%c0, %c0_0] : memref<8x128xbf16, #tpu.memory_space<vmem>>, vector<8x128xbf16>
    %c0_1 = arith.constant 0 : index
    %c0_2 = arith.constant 0 : index
    %1 = vector.load %arg2[%c0_1, %c0_2] : memref<128x128xbf16, #tpu.memory_space<vmem>>, vector<128x128xbf16>
    %cst = arith.constant dense<0.000000e+00> : vector<8x128xf32>
    %2 = tpu.matmul %0, %1, %cst {dimension_numbers = #tpu.dot_dimension_numbers<[1], [0], [0], [1], [0, 0, 1, 1], [], []>} : vector<8x128xbf16>, vector<128x128xbf16>, vector<8x128xf32> -> vector<8x128xf32>
    %c0_3 = arith.constant 0 : index
    %c0_4 = arith.constant 0 : index
    %c0_5 = arith.constant 0 : index
    %3 = vector.load %arg4[%c0_3, %c0_4, %c0_5] : memref<5x1x128xf32, #tpu.memory_space<vmem>>, vector<1x1x128xf32>
    %4 = vector.shape_cast %3 : vector<1x1x128xf32> to vector<1x128xf32>
    %5 = vector.broadcast %4 : vector<1x128xf32> to vector<8x128xf32>
    %6 = arith.addf %2, %5 : vector<8x128xf32>
    %cst_6 = arith.constant 0.000000e+00 : f32
    %7 = vector.broadcast %cst_6 : f32 to vector<8x128xf32>
    %8 = arith.maximumf %6, %7 : vector<8x128xf32>
    %9 = arith.truncf %8 : vector<8x128xf32> to vector<8x128xbf16>
    %c0_7 = arith.constant 0 : index
    %c0_8 = arith.constant 0 : index
    %c0_9 = arith.constant 0 : index
    %10 = vector.load %arg3[%c0_7, %c0_8, %c0_9] : memref<4x128x128xbf16, #tpu.memory_space<vmem>>, vector<1x128x128xbf16>
    %11 = vector.shape_cast %10 : vector<1x128x128xbf16> to vector<128x128xbf16>
    %cst_10 = arith.constant dense<0.000000e+00> : vector<8x128xf32>
    %12 = tpu.matmul %9, %11, %cst_10 {dimension_numbers = #tpu.dot_dimension_numbers<[1], [0], [0], [1], [0, 0, 1, 1], [], []>} : vector<8x128xbf16>, vector<128x128xbf16>, vector<8x128xf32> -> vector<8x128xf32>
    %c1 = arith.constant 1 : index
    %c0_11 = arith.constant 0 : index
    %c0_12 = arith.constant 0 : index
    %13 = vector.load %arg4[%c1, %c0_11, %c0_12] : memref<5x1x128xf32, #tpu.memory_space<vmem>>, vector<1x1x128xf32>
    %14 = vector.shape_cast %13 : vector<1x1x128xf32> to vector<1x128xf32>
    %15 = vector.broadcast %14 : vector<1x128xf32> to vector<8x128xf32>
    %16 = arith.addf %12, %15 : vector<8x128xf32>
    %cst_13 = arith.constant 0.000000e+00 : f32
    %17 = vector.broadcast %cst_13 : f32 to vector<8x128xf32>
    %18 = arith.maximumf %16, %17 : vector<8x128xf32>
    %19 = arith.truncf %18 : vector<8x128xf32> to vector<8x128xbf16>
    %c1_14 = arith.constant 1 : index
    %c0_15 = arith.constant 0 : index
    %c0_16 = arith.constant 0 : index
    %20 = vector.load %arg3[%c1_14, %c0_15, %c0_16] : memref<4x128x128xbf16, #tpu.memory_space<vmem>>, vector<1x128x128xbf16>
    %21 = vector.shape_cast %20 : vector<1x128x128xbf16> to vector<128x128xbf16>
    %cst_17 = arith.constant dense<0.000000e+00> : vector<8x128xf32>
    %22 = tpu.matmul %19, %21, %cst_17 {dimension_numbers = #tpu.dot_dimension_numbers<[1], [0], [0], [1], [0, 0, 1, 1], [], []>} : vector<8x128xbf16>, vector<128x128xbf16>, vector<8x128xf32> -> vector<8x128xf32>
    %c2 = arith.constant 2 : index
    %c0_18 = arith.constant 0 : index
    %c0_19 = arith.constant 0 : index
    %23 = vector.load %arg4[%c2, %c0_18, %c0_19] : memref<5x1x128xf32, #tpu.memory_space<vmem>>, vector<1x1x128xf32>
    %24 = vector.shape_cast %23 : vector<1x1x128xf32> to vector<1x128xf32>
    %25 = vector.broadcast %24 : vector<1x128xf32> to vector<8x128xf32>
    %26 = arith.addf %22, %25 : vector<8x128xf32>
    %cst_20 = arith.constant 0.000000e+00 : f32
    %27 = vector.broadcast %cst_20 : f32 to vector<8x128xf32>
    %28 = arith.maximumf %26, %27 : vector<8x128xf32>
    %29 = arith.truncf %28 : vector<8x128xf32> to vector<8x128xbf16>
    %c2_21 = arith.constant 2 : index
    %c0_22 = arith.constant 0 : index
    %c0_23 = arith.constant 0 : index
    %30 = vector.load %arg3[%c2_21, %c0_22, %c0_23] : memref<4x128x128xbf16, #tpu.memory_space<vmem>>, vector<1x128x128xbf16>
    %31 = vector.shape_cast %30 : vector<1x128x128xbf16> to vector<128x128xbf16>
    %cst_24 = arith.constant dense<0.000000e+00> : vector<8x128xf32>
    %32 = tpu.matmul %29, %31, %cst_24 {dimension_numbers = #tpu.dot_dimension_numbers<[1], [0], [0], [1], [0, 0, 1, 1], [], []>} : vector<8x128xbf16>, vector<128x128xbf16>, vector<8x128xf32> -> vector<8x128xf32>
    %c3 = arith.constant 3 : index
    %c0_25 = arith.constant 0 : index
    %c0_26 = arith.constant 0 : index
    %33 = vector.load %arg4[%c3, %c0_25, %c0_26] : memref<5x1x128xf32, #tpu.memory_space<vmem>>, vector<1x1x128xf32>
    %34 = vector.shape_cast %33 : vector<1x1x128xf32> to vector<1x128xf32>
    %35 = vector.broadcast %34 : vector<1x128xf32> to vector<8x128xf32>
    %36 = arith.addf %32, %35 : vector<8x128xf32>
    %cst_27 = arith.constant 0.000000e+00 : f32
    %37 = vector.broadcast %cst_27 : f32 to vector<8x128xf32>
    %38 = arith.maximumf %36, %37 : vector<8x128xf32>
    %39 = arith.truncf %38 : vector<8x128xf32> to vector<8x128xbf16>
    %c3_28 = arith.constant 3 : index
    %c0_29 = arith.constant 0 : index
    %c0_30 = arith.constant 0 : index
    %40 = vector.load %arg3[%c3_28, %c0_29, %c0_30] : memref<4x128x128xbf16, #tpu.memory_space<vmem>>, vector<1x128x128xbf16>
    %41 = vector.shape_cast %40 : vector<1x128x128xbf16> to vector<128x128xbf16>
    %cst_31 = arith.constant dense<0.000000e+00> : vector<8x128xf32>
    %42 = tpu.matmul %39, %41, %cst_31 {dimension_numbers = #tpu.dot_dimension_numbers<[1], [0], [0], [1], [0, 0, 1, 1], [], []>} : vector<8x128xbf16>, vector<128x128xbf16>, vector<8x128xf32> -> vector<8x128xf32>
    %c4 = arith.constant 4 : index
    %c0_32 = arith.constant 0 : index
    %c0_33 = arith.constant 0 : index
    %43 = vector.load %arg4[%c4, %c0_32, %c0_33] : memref<5x1x128xf32, #tpu.memory_space<vmem>>, vector<1x1x128xf32>
    %44 = vector.shape_cast %43 : vector<1x1x128xf32> to vector<1x128xf32>
    %45 = vector.broadcast %44 : vector<1x128xf32> to vector<8x128xf32>
    %46 = arith.addf %42, %45 : vector<8x128xf32>
    %c0_34 = arith.constant 0 : index
    %c0_35 = arith.constant 0 : index
    %47 = vector.load %arg5[%c0_34, %c0_35] : memref<8x128xf32, #tpu.memory_space<vmem>>, vector<8x128xf32>
    tpu.vector_store %arg5[%c0_34, %c0_35], %46 {strides = array<i32>} : memref<8x128xf32, #tpu.memory_space<vmem>>, vector<8x128xf32>,
    return
  }
  func.func @transform_0(%arg0: i32) -> (i32, i32) {
    %c0_i32 = arith.constant 0 : i32
    %c0_i32_0 = arith.constant 0 : i32
    return %arg0, %c0_i32 : i32, i32
  }
  func.func @transform_1(%arg0: i32) -> (i32, i32) {
    %c0_i32 = arith.constant 0 : i32
    %c0_i32_0 = arith.constant 0 : i32
    %c0_i32_1 = arith.constant 0 : i32
    return %c0_i32, %c0_i32_0 : i32, i32
  }
  func.func @transform_2(%arg0: i32) -> (i32, i32, i32) {
    %c0_i32 = arith.constant 0 : i32
    %c0_i32_0 = arith.constant 0 : i32
    %c0_i32_1 = arith.constant 0 : i32
    %c0_i32_2 = arith.constant 0 : i32
    return %c0_i32, %c0_i32_0, %c0_i32_1 : i32, i32, i32
  }
  func.func @transform_3(%arg0: i32) -> (i32, i32, i32) {
    %c0_i32 = arith.constant 0 : i32
    %c0_i32_0 = arith.constant 0 : i32
    %c0_i32_1 = arith.constant 0 : i32
    %c0_i32_2 = arith.constant 0 : i32
    return %c0_i32, %c0_i32_0, %c0_i32_1 : i32, i32, i32
  }
  func.func @transform_4(%arg0: i32) -> (i32, i32) {
    %c0_i32 = arith.constant 0 : i32
    %c0_i32_0 = arith.constant 0 : i32
    return %arg0, %c0_i32 : i32, i32
  }
}

</mosaic_0001>

<llo_original>
// kernel: tpu_custom_call.1
$region0: #{tpu_custom_call.1}
  #allocation0 [shape = 'u32[]', space=smem, size = 0x4, offset = 0x4, fixed_abs, tag = 'smem constant byte address 0x4 - core index']
  #allocation1 [shape = 'u32[72,128]{1,0:T(1,128)}', space=vmem, size = 0x9000, scoped, tag = 'internal scratch']
  %s0 = inlined_call_operand.hbm [shape: bf16[8,128], index: 0, kind: input, shape index: {}]
  %s1 = inlined_call_operand.hbm [shape: bf16[128,128], index: 1, kind: input, shape index: {}]
  %s2 = inlined_call_operand.hbm [shape: bf16[4,128,128], index: 2, kind: input, shape index: {}]
  %s3 = inlined_call_operand.hbm [shape: f32[5,1,128], index: 3, kind: input, shape index: {}]
  %s4 = inlined_call_operand.hbm [shape: f32[8,128], index: 4, kind: output, shape index: {}]
  %s5 = sld [smem:[#allocation0]]
  $region42: #{tpu_custom_call.1} parent=0
    _
  %s7 = ssub.s32 1, %s5
  %s8 = scalar_select 0, %s7, %s5
  $region1: #{tpu_custom_call.1} parent=0
    #allocation2 [shape = 'u8[2048]{0}', space=vmem, size = 0x800, scoped, tag = 'input window, operand 0, single buffered']
    #allocation3 [shape = 's32[1]{0}', space=sflag, size = 0x4, scoped, tag = 'scoped memory for tpu_custom_call.1']
    #allocation4 [shape = 's32[1]{0}', space=sflag, size = 0x4, scoped, tag = 'scoped memory for tpu_custom_call.1']
    #allocation5 [shape = 'u8[32768]{0}', space=vmem, size = 0x8000, scoped, tag = 'input window, operand 1, single buffered']
    #allocation6 [shape = 's32[1]{0}', space=sflag, size = 0x4, scoped, tag = 'scoped memory for tpu_custom_call.1']
    #allocation7 [shape = 'u8[131072]{0}', space=vmem, size = 0x20000, scoped, tag = 'input window, operand 2, single buffered']
    #allocation8 [shape = 'u8[2560]{0}', space=vmem, size = 0xc00, scoped, tag = 'input window, operand 3, single buffered']
    #allocation9 [shape = 's32[1]{0}', space=sflag, size = 0x4, scoped, tag = 'scoped memory for tpu_custom_call.1']
    #allocation10 [shape = 'u8[4096]{0}', space=vmem, size = 0x1000, scoped, tag = 'output window, operand 0, single buffered']
    %9 = vsyncpa [#allocation3], 0
    %10 = vsyncpa [#allocation6], 0
    %11 = vsyncpa [#allocation9], 0
    %12 = vsyncpa [#allocation4], 0
    // Predicated region
    $region2: #{tpu_custom_call.1} parent=1 // pred_check
      _
    $region3: #{tpu_custom_call.1} parent=1 // pred_check_branch
      %14 = sbr.rel (0) target = $region5
    $region4: #{tpu_custom_call.1} parent=1 // pred_region
      %16 = vsyncadd [#allocation3], 0
      %s18 = sshll.u32 %s0, 4
      %s19 = int_to_ptr.hbm [resolvable:$true] %s18
      %s20 = sshll.u32 [#allocation2], 4
      %s21 = int_to_ptr.vmem [resolvable:$true] %s20
      %23 = dma.hbm_to_vmem [thread:$0]  %s19, 64, %s21, [#allocation3]
    $region5: #{tpu_custom_call.1} parent=1 // pred_fallthru
      _
    // Predicated region
    $region6: #{tpu_custom_call.1} parent=1 // pred_check
      _
    $region7: #{tpu_custom_call.1} parent=1 // pred_check_branch
      %25 = sbr.rel (0) target = $region9
    $region8: #{tpu_custom_call.1} parent=1 // pred_region
      %27 = vsyncadd [#allocation6], 0
      %s28 = sshll.u32 %s1, 4
      %s29 = int_to_ptr.hbm [resolvable:$true] %s28
      %s30 = sshll.u32 [#allocation5], 4
      %s31 = int_to_ptr.vmem [resolvable:$true] %s30
      %36 = dma.hbm_to_vmem [thread:$0]  %s29, 1024, %s31, [#allocation6], 64, 64, 4
    $region9: #{tpu_custom_call.1} parent=1 // pred_fallthru
      _
    // Predicated region
    $region10: #{tpu_custom_call.1} parent=1 // pred_check
      _
    $region11: #{tpu_custom_call.1} parent=1 // pred_check_branch
      %38 = sbr.rel (0) target = $region13
    $region12: #{tpu_custom_call.1} parent=1 // pred_region
      %40 = vsyncadd [#allocation6], 0
      %s41 = sshll.u32 %s2, 4
      %s42 = int_to_ptr.hbm [resolvable:$true] %s41
      %s43 = sshll.u32 [#allocation7], 4
      %s44 = int_to_ptr.vmem [resolvable:$true] %s43
      %49 = dma.hbm_to_vmem [thread:$0]  %s42, 4096, %s44, [#allocation6], 64, 64, 4
    $region13: #{tpu_custom_call.1} parent=1 // pred_fallthru
      _
    // Predicated region
    $region14: #{tpu_custom_call.1} parent=1 // pred_check
      _
    $region15: #{tpu_custom_call.1} parent=1 // pred_check_branch
      %51 = sbr.rel (0) target = $region17
    $region16: #{tpu_custom_call.1} parent=1 // pred_region
      %53 = vsyncadd [#allocation9], 0
      %s54 = sshll.u32 %s3, 4
      %s55 = int_to_ptr.hbm [resolvable:$true] %s54
      %s56 = sshll.u32 [#allocation8], 4
      %s57 = int_to_ptr.vmem [resolvable:$true] %s56
      %62 = dma.hbm_to_vmem [thread:$0]  %s55, 80, %s57, [#allocation9], 16, 16, 1
    $region17: #{tpu_custom_call.1} parent=1 // pred_fallthru
      _
    // Predicated region
    $region18: #{tpu_custom_call.1} parent=1 // pred_check
      _
    $region19: #{tpu_custom_call.1} parent=1 // pred_check_branch
      %64 = sbr.rel (0) target = $region21
    $region20: #{tpu_custom_call.1} parent=1 // pred_region
      %66 = dma.done [#allocation3], 64
    $region21: #{tpu_custom_call.1} parent=1 // pred_fallthru
      _
    // Predicated region
    $region22: #{tpu_custom_call.1} parent=1 // pred_check
      _
    $region23: #{tpu_custom_call.1} parent=1 // pred_check_branch
      %68 = sbr.rel (0) target = $region25
    $region24: #{tpu_custom_call.1} parent=1 // pred_region
      %70 = dma.done [#allocation6], 1024
    $region25: #{tpu_custom_call.1} parent=1 // pred_fallthru
      _
    // Predicated region
    $region26: #{tpu_custom_call.1} parent=1 // pred_check
      _
    $region27: #{tpu_custom_call.1} parent=1 // pred_check_branch
      %72 = sbr.rel (0) target = $region29
    $region28: #{tpu_custom_call.1} parent=1 // pred_region
      %74 = dma.done [#allocation6], 4096
    $region29: #{tpu_custom_call.1} parent=1 // pred_fallthru
      _
    // Predicated region
    $region30: #{tpu_custom_call.1} parent=1 // pred_check
      _
    $region31: #{tpu_custom_call.1} parent=1 // pred_check_branch
      %76 = sbr.rel (0) target = $region33
    $region32: #{tpu_custom_call.1} parent=1 // pred_region
      %78 = dma.done [#allocation9], 80
    $region33: #{tpu_custom_call.1} parent=1 // pred_fallthru
      _
    %v79 = vld [vmem:[#allocation2] sm:$0xf]
    %v80 = vld [vmem:[#allocation5] sm:$0xf]
    %v81 = vld [vmem:[#allocation5 + $0x4] sm:$0xf]
    %v82 = vld [vmem:[#allocation5 + $0x8] sm:$0xf]
    %v83 = vld [vmem:[#allocation5 + $0xc] sm:$0xf]
    %v84 = vld [vmem:[#allocation5 + $0x10] sm:$0xf]
    %v85 = vld [vmem:[#allocation5 + $0x14] sm:$0xf]
    %v86 = vld [vmem:[#allocation5 + $0x18] sm:$0xf]
    %v87 = vld [vmem:[#allocation5 + $0x1c] sm:$0xf]
    %v88 = vld [vmem:[#allocation5 + $0x20] sm:$0xf]
    %v89 = vld [vmem:[#allocation5 + $0x24] sm:$0xf]
    %v90 = vld [vmem:[#allocation5 + $0x28] sm:$0xf]
    %v91 = vld [vmem:[#allocation5 + $0x2c] sm:$0xf]
    %v92 = vld [vmem:[#allocation5 + $0x30] sm:$0xf]
    %v93 = vld [vmem:[#allocation5 + $0x34] sm:$0xf]
    %v94 = vld [vmem:[#allocation5 + $0x38] sm:$0xf]
    %v95 = vld [vmem:[#allocation5 + $0x3c] sm:$0xf]
    %v96 = vld [vmem:[#allocation8] sm:$0x1]
    %v98 = vperm.slane %v96, 0
    %v116 = vunpack.c.l.b16 %v80
    %v117 = vunpack.c.l.b16 %v81
    %v118 = vunpack.c.l.b16 %v82
    %v119 = vunpack.c.l.b16 %v83
    %v120 = vunpack.c.l.b16 %v84
    %v121 = vunpack.c.l.b16 %v85
    %v122 = vunpack.c.l.b16 %v86
    %v123 = vunpack.c.l.b16 %v87
    %v124 = vunpack.c.l.b16 %v88
    %v125 = vunpack.c.l.b16 %v89
    %v126 = vunpack.c.l.b16 %v90
    %v127 = vunpack.c.l.b16 %v91
    %v128 = vunpack.c.l.b16 %v92
    %v129 = vunpack.c.l.b16 %v93
    %v130 = vunpack.c.l.b16 %v94
    %v131 = vunpack.c.l.b16 %v95
    %v132 = vpack.c.b16 %v117, %v116
    %v133 = vpack.c.b16 %v119, %v118
    %v134 = vpack.c.b16 %v121, %v120
    %v135 = vpack.c.b16 %v123, %v122
    %v136 = vpack.c.b16 %v125, %v124
    %v137 = vpack.c.b16 %v127, %v126
    %v138 = vpack.c.b16 %v129, %v128
    %v139 = vpack.c.b16 %v131, %v130
    %148 = vmatpush.bf16.msra.mxu0 %v139
    %149 = vmatpush.bf16.msra.mxu0 %v138
    %150 = vmatpush.bf16.msra.mxu0 %v137
    %151 = vmatpush.bf16.msra.mxu0 %v136
    %152 = vmatpush.bf16.msra.mxu0 %v135
    %153 = vmatpush.bf16.msra.mxu0 %v134
    %154 = vmatpush.bf16.msra.mxu0 %v133
    %155 = vmatpush.bf16.msra.mxu0 %v132
    %156 = vmatmul.bf16.gmra.mxu0 %v79
    %v157 = vpop.f32.mrf.mxu0
    %v158 = vadd.f32 %v98, %v157
    %v159 = vpop.f32.mrf.mxu0
    %160 = vdwg.mxu0
    %v161 = vmax.f32 %v158, 0.0
    %v162 = vpack.c.bf16 %v161, %v161
    %v163 = vld [vmem:[#allocation7] sm:$0xf]
    %v164 = vld [vmem:[#allocation7 + $0x4] sm:$0xf]
    %v165 = vld [vmem:[#allocation7 + $0x8] sm:$0xf]
    %v166 = vld [vmem:[#allocation7 + $0xc] sm:$0xf]
    %v167 = vld [vmem:[#allocation7 + $0x10] sm:$0xf]
    %v168 = vld [vmem:[#allocation7 + $0x14] sm:$0xf]
    %v169 = vld [vmem:[#allocation7 + $0x18] sm:$0xf]
    %v170 = vld [vmem:[#allocation7 + $0x1c] sm:$0xf]
    %v171 = vld [vmem:[#allocation7 + $0x20] sm:$0xf]
    %v172 = vld [vmem:[#allocation7 + $0x24] sm:$0xf]
    %v173 = vld [vmem:[#allocation7 + $0x28] sm:$0xf]
    %v174 = vld [vmem:[#allocation7 + $0x2c] sm:$0xf]
    %v175 = vld [vmem:[#allocation7 + $0x30] sm:$0xf]
    %v176 = vld [vmem:[#allocation7 + $0x34] sm:$0xf]
    %v177 = vld [vmem:[#allocation7 + $0x38] sm:$0xf]
    %v178 = vld [vmem:[#allocation7 + $0x3c] sm:$0xf]
    %s179 = scalar_lea.vmem [#allocation8], 1
    %v180 = vld [vmem:[%s179] sm:$0x1]
    %v182 = vperm.slane %v180, 0
    %v200 = vunpack.c.l.b16 %v163
    %v201 = vunpack.c.l.b16 %v164
    %v202 = vunpack.c.l.b16 %v165
    %v203 = vunpack.c.l.b16 %v166
    %v204 = vunpack.c.l.b16 %v167
    %v205 = vunpack.c.l.b16 %v168
    %v206 = vunpack.c.l.b16 %v169
    %v207 = vunpack.c.l.b16 %v170
    %v208 = vunpack.c.l.b16 %v171
    %v209 = vunpack.c.l.b16 %v172
    %v210 = vunpack.c.l.b16 %v173
    %v211 = vunpack.c.l.b16 %v174
    %v212 = vunpack.c.l.b16 %v175
    %v213 = vunpack.c.l.b16 %v176
    %v214 = vunpack.c.l.b16 %v177
    %v215 = vunpack.c.l.b16 %v178
    %v216 = vpack.c.b16 %v201, %v200
    %v217 = vpack.c.b16 %v203, %v202
    %v218 = vpack.c.b16 %v205, %v204
    %v219 = vpack.c.b16 %v207, %v206
    %v220 = vpack.c.b16 %v209, %v208
    %v221 = vpack.c.b16 %v211, %v210
    %v222 = vpack.c.b16 %v213, %v212
    %v223 = vpack.c.b16 %v215, %v214
    %232 = vmatpush.bf16.msra.mxu0 %v223
    %233 = vmatpush.bf16.msra.mxu0 %v222
    %234 = vmatpush.bf16.msra.mxu0 %v221
    %235 = vmatpush.bf16.msra.mxu0 %v220
    %236 = vmatpush.bf16.msra.mxu0 %v219
    %237 = vmatpush.bf16.msra.mxu0 %v218
    %238 = vmatpush.bf16.msra.mxu0 %v217
    %239 = vmatpush.bf16.msra.mxu0 %v216
    %240 = vmatmul.bf16.gmra.mxu0 %v162
    %v241 = vpop.f32.mrf.mxu0
    %v242 = vadd.f32 %v182, %v241
    %v243 = vpop.f32.mrf.mxu0
    %244 = vdwg.mxu0
    %v245 = vmax.f32 %v242, 0.0
    %v246 = vpack.c.bf16 %v245, %v245
    %s247 = scalar_lea.vmem [#allocation7], 64
    %v248 = vld [vmem:[%s247] sm:$0xf]
    %v249 = vld [vmem:[%s247 + $0x4] sm:$0xf]
    %v250 = vld [vmem:[%s247 + $0x8] sm:$0xf]
    %v251 = vld [vmem:[%s247 + $0xc] sm:$0xf]
    %v252 = vld [vmem:[%s247 + $0x10] sm:$0xf]
    %v253 = vld [vmem:[%s247 + $0x14] sm:$0xf]
    %v254 = vld [vmem:[%s247 + $0x18] sm:$0xf]
    %v255 = vld [vmem:[%s247 + $0x1c] sm:$0xf]
    %v256 = vld [vmem:[%s247 + $0x20] sm:$0xf]
    %v257 = vld [vmem:[%s247 + $0x24] sm:$0xf]
    %v258 = vld [vmem:[%s247 + $0x28] sm:$0xf]
    %v259 = vld [vmem:[%s247 + $0x2c] sm:$0xf]
    %v260 = vld [vmem:[%s247 + $0x30] sm:$0xf]
    %v261 = vld [vmem:[%s247 + $0x34] sm:$0xf]
    %v262 = vld [vmem:[%s247 + $0x38] sm:$0xf]
    %v263 = vld [vmem:[%s247 + $0x3c] sm:$0xf]
    %s264 = scalar_lea.vmem [#allocation8], 2
    %v265 = vld [vmem:[%s264] sm:$0x1]
    %v267 = vperm.slane %v265, 0
    %v285 = vunpack.c.l.b16 %v248
    %v286 = vunpack.c.l.b16 %v249
    %v287 = vunpack.c.l.b16 %v250
    %v288 = vunpack.c.l.b16 %v251
    %v289 = vunpack.c.l.b16 %v252
    %v290 = vunpack.c.l.b16 %v253
    %v291 = vunpack.c.l.b16 %v254
    %v292 = vunpack.c.l.b16 %v255
    %v293 = vunpack.c.l.b16 %v256
    %v294 = vunpack.c.l.b16 %v257
    %v295 = vunpack.c.l.b16 %v258
    %v296 = vunpack.c.l.b16 %v259
    %v297 = vunpack.c.l.b16 %v260
    %v298 = vunpack.c.l.b16 %v261
    %v299 = vunpack.c.l.b16 %v262
    %v300 = vunpack.c.l.b16 %v263
    %v301 = vpack.c.b16 %v286, %v285
    %v302 = vpack.c.b16 %v288, %v287
    %v303 = vpack.c.b16 %v290, %v289
    %v304 = vpack.c.b16 %v292, %v291
    %v305 = vpack.c.b16 %v294, %v293
    %v306 = vpack.c.b16 %v296, %v295
    %v307 = vpack.c.b16 %v298, %v297
    %v308 = vpack.c.b16 %v300, %v299
    %317 = vmatpush.bf16.msra.mxu0 %v308
    %318 = vmatpush.bf16.msra.mxu0 %v307
    %319 = vmatpush.bf16.msra.mxu0 %v306
    %320 = vmatpush.bf16.msra.mxu0 %v305
    %321 = vmatpush.bf16.msra.mxu0 %v304
    %322 = vmatpush.bf16.msra.mxu0 %v303
    %323 = vmatpush.bf16.msra.mxu0 %v302
    %324 = vmatpush.bf16.msra.mxu0 %v301
    %325 = vmatmul.bf16.gmra.mxu0 %v246
    %v326 = vpop.f32.mrf.mxu0
    %v327 = vadd.f32 %v267, %v326
    %v328 = vpop.f32.mrf.mxu0
    %329 = vdwg.mxu0
    %v330 = vmax.f32 %v327, 0.0
    %v331 = vpack.c.bf16 %v330, %v330
    %s332 = scalar_lea.vmem [#allocation7], 128
    %v333 = vld [vmem:[%s332] sm:$0xf]
    %v334 = vld [vmem:[%s332 + $0x4] sm:$0xf]
    %v335 = vld [vmem:[%s332 + $0x8] sm:$0xf]
    %v336 = vld [vmem:[%s332 + $0xc] sm:$0xf]
    %v337 = vld [vmem:[%s332 + $0x10] sm:$0xf]
    %v338 = vld [vmem:[%s332 + $0x14] sm:$0xf]
    %v339 = vld [vmem:[%s332 + $0x18] sm:$0xf]
    %v340 = vld [vmem:[%s332 + $0x1c] sm:$0xf]
    %v341 = vld [vmem:[%s332 + $0x20] sm:$0xf]
    %v342 = vld [vmem:[%s332 + $0x24] sm:$0xf]
    %v343 = vld [vmem:[%s332 + $0x28] sm:$0xf]
    %v344 = vld [vmem:[%s332 + $0x2c] sm:$0xf]
    %v345 = vld [vmem:[%s332 + $0x30] sm:$0xf]
    %v346 = vld [vmem:[%s332 + $0x34] sm:$0xf]
    %v347 = vld [vmem:[%s332 + $0x38] sm:$0xf]
    %v348 = vld [vmem:[%s332 + $0x3c] sm:$0xf]
    %s349 = scalar_lea.vmem [#allocation8], 3
    %v350 = vld [vmem:[%s349] sm:$0x1]
    %v352 = vperm.slane %v350, 0
    %v370 = vunpack.c.l.b16 %v333
    %v371 = vunpack.c.l.b16 %v334
    %v372 = vunpack.c.l.b16 %v335
    %v373 = vunpack.c.l.b16 %v336
    %v374 = vunpack.c.l.b16 %v337
    %v375 = vunpack.c.l.b16 %v338
    %v376 = vunpack.c.l.b16 %v339
    %v377 = vunpack.c.l.b16 %v340
    %v378 = vunpack.c.l.b16 %v341
    %v379 = vunpack.c.l.b16 %v342
    %v380 = vunpack.c.l.b16 %v343
    %v381 = vunpack.c.l.b16 %v344
    %v382 = vunpack.c.l.b16 %v345
    %v383 = vunpack.c.l.b16 %v346
    %v384 = vunpack.c.l.b16 %v347
    %v385 = vunpack.c.l.b16 %v348
    %v386 = vpack.c.b16 %v371, %v370
    %v387 = vpack.c.b16 %v373, %v372
    %v388 = vpack.c.b16 %v375, %v374
    %v389 = vpack.c.b16 %v377, %v376
    %v390 = vpack.c.b16 %v379, %v378
    %v391 = vpack.c.b16 %v381, %v380
    %v392 = vpack.c.b16 %v383, %v382
    %v393 = vpack.c.b16 %v385, %v384
    %402 = vmatpush.bf16.msra.mxu0 %v393
    %403 = vmatpush.bf16.msra.mxu0 %v392
    %404 = vmatpush.bf16.msra.mxu0 %v391
    %405 = vmatpush.bf16.msra.mxu0 %v390
    %406 = vmatpush.bf16.msra.mxu0 %v389
    %407 = vmatpush.bf16.msra.mxu0 %v388
    %408 = vmatpush.bf16.msra.mxu0 %v387
    %409 = vmatpush.bf16.msra.mxu0 %v386
    %410 = vmatmul.bf16.gmra.mxu0 %v331
    %v411 = vpop.f32.mrf.mxu0
    %v412 = vadd.f32 %v352, %v411
    %v413 = vpop.f32.mrf.mxu0
    %414 = vdwg.mxu0
    %v415 = vmax.f32 %v412, 0.0
    %v416 = vpack.c.bf16 %v415, %v415
    %s417 = scalar_lea.vmem [#allocation7], 192
    %v418 = vld [vmem:[%s417] sm:$0xf]
    %v419 = vld [vmem:[%s417 + $0x4] sm:$0xf]
    %v420 = vld [vmem:[%s417 + $0x8] sm:$0xf]
    %v421 = vld [vmem:[%s417 + $0xc] sm:$0xf]
    %v422 = vld [vmem:[%s417 + $0x10] sm:$0xf]
    %v423 = vld [vmem:[%s417 + $0x14] sm:$0xf]
    %v424 = vld [vmem:[%s417 + $0x18] sm:$0xf]
    %v425 = vld [vmem:[%s417 + $0x1c] sm:$0xf]
    %v426 = vld [vmem:[%s417 + $0x20] sm:$0xf]
    %v427 = vld [vmem:[%s417 + $0x24] sm:$0xf]
    %v428 = vld [vmem:[%s417 + $0x28] sm:$0xf]
    %v429 = vld [vmem:[%s417 + $0x2c] sm:$0xf]
    %v430 = vld [vmem:[%s417 + $0x30] sm:$0xf]
    %v431 = vld [vmem:[%s417 + $0x34] sm:$0xf]
    %v432 = vld [vmem:[%s417 + $0x38] sm:$0xf]
    %v433 = vld [vmem:[%s417 + $0x3c] sm:$0xf]
    %s434 = scalar_lea.vmem [#allocation8], 4
    %v435 = vld [vmem:[%s434] sm:$0x1]
    %v437 = vperm.slane %v435, 0
    %v455 = vunpack.c.l.b16 %v418
    %v456 = vunpack.c.l.b16 %v419
    %v457 = vunpack.c.l.b16 %v420
    %v458 = vunpack.c.l.b16 %v421
    %v459 = vunpack.c.l.b16 %v422
    %v460 = vunpack.c.l.b16 %v423
    %v461 = vunpack.c.l.b16 %v424
    %v462 = vunpack.c.l.b16 %v425
    %v463 = vunpack.c.l.b16 %v426
    %v464 = vunpack.c.l.b16 %v427
    %v465 = vunpack.c.l.b16 %v428
    %v466 = vunpack.c.l.b16 %v429
    %v467 = vunpack.c.l.b16 %v430
    %v468 = vunpack.c.l.b16 %v431
    %v469 = vunpack.c.l.b16 %v432
    %v470 = vunpack.c.l.b16 %v433
    %v471 = vpack.c.b16 %v456, %v455
    %v472 = vpack.c.b16 %v458, %v457
    %v473 = vpack.c.b16 %v460, %v459
    %v474 = vpack.c.b16 %v462, %v461
    %v475 = vpack.c.b16 %v464, %v463
    %v476 = vpack.c.b16 %v466, %v465
    %v477 = vpack.c.b16 %v468, %v467
    %v478 = vpack.c.b16 %v470, %v469
    %487 = vmatpush.bf16.msra.mxu0 %v478
    %488 = vmatpush.bf16.msra.mxu0 %v477
    %489 = vmatpush.bf16.msra.mxu0 %v476
    %490 = vmatpush.bf16.msra.mxu0 %v475
    %491 = vmatpush.bf16.msra.mxu0 %v474
    %492 = vmatpush.bf16.msra.mxu0 %v473
    %493 = vmatpush.bf16.msra.mxu0 %v472
    %494 = vmatpush.bf16.msra.mxu0 %v471
    %495 = vmatmul.bf16.gmra.mxu0 %v416
    %v496 = vpop.f32.mrf.mxu0
    %v497 = vadd.f32 %v437, %v496
    %v498 = vpop.f32.mrf.mxu0
    %499 = vdwg.mxu0
    %500 = vst [vmem:[#allocation10] sm:$0xff] %v497
    // Predicated region
    $region34: #{tpu_custom_call.1} parent=1 // pred_check
      _
    $region35: #{tpu_custom_call.1} parent=1 // pred_check_branch
      %502 = sbr.rel (0) target = $region37
    $region36: #{tpu_custom_call.1} parent=1 // pred_region
      %504 = vsyncadd [#allocation4], 0
      %s506 = sshll.u32 [#allocation10], 4
      %s507 = int_to_ptr.vmem [resolvable:$true] %s506
      %s508 = sshll.u32 %s4, 4
      %s509 = int_to_ptr.hbm [resolvable:$true] %s508
      %511 = dma.vmem_to_hbm [thread:$0]  %s507, 128, %s509, [#allocation4]
    $region37: #{tpu_custom_call.1} parent=1 // pred_fallthru
      _
    // Predicated region
    $region38: #{tpu_custom_call.1} parent=1 // pred_check
      _
    $region39: #{tpu_custom_call.1} parent=1 // pred_check_branch
      %513 = sbr.rel (0) target = $region41
    $region40: #{tpu_custom_call.1} parent=1 // pred_region
      %515 = dma.done [#allocation4], 128
    $region41: #{tpu_custom_call.1} parent=1 // pred_fallthru
      _
    %516 = vsyncpa [#allocation3], 1
    %517 = vsyncpa [#allocation6], 1
    %518 = vsyncpa [#allocation9], 1
    %519 = vsyncpa [#allocation4], 1

// kernel: tpu_custom_call.1
$region0: #{tpu_custom_call.1}
  #allocation0 [shape = 'u32[]', space=smem, size = 0x4, offset = 0x4, fixed_abs, tag = 'smem constant byte address 0x4 - core index']
  #allocation1 [shape = 'u32[72,128]{1,0:T(1,128)}', space=vmem, size = 0x9000, scoped, tag = 'internal scratch']
  %s0 = inlined_call_operand.hbm [shape: bf16[8,128], index: 0, kind: input, shape index: {}]
  %s1 = inlined_call_operand.hbm [shape: bf16[128,128], index: 1, kind: input, shape index: {}]
  %s2 = inlined_call_operand.hbm [shape: bf16[4,128,128], index: 2, kind: input, shape index: {}]
  %s3 = inlined_call_operand.hbm [shape: f32[5,1,128], index: 3, kind: input, shape index: {}]
  %s4 = inlined_call_operand.hbm [shape: f32[8,128], index: 4, kind: output, shape index: {}]
  %s5 = sld [smem:[#allocation0]]
  $region42: #{tpu_custom_call.1} parent=0
    _
  %s7 = ssub.s32 1, %s5
  %s8 = scalar_select 0, %s7, %s5
  $region1: #{tpu_custom_call.1} parent=0
    #allocation2 [shape = 'u8[2048]{0}', space=vmem, size = 0x800, scoped, tag = 'input window, operand 0, single buffered']
    #allocation3 [shape = 's32[1]{0}', space=sflag, size = 0x4, scoped, tag = 'scoped memory for tpu_custom_call.1']
    #allocation4 [shape = 's32[1]{0}', space=sflag, size = 0x4, scoped, tag = 'scoped memory for tpu_custom_call.1']
    #allocation5 [shape = 'u8[32768]{0}', space=vmem, size = 0x8000, scoped, tag = 'input window, operand 1, single buffered']
    #allocation6 [shape = 's32[1]{0}', space=sflag, size = 0x4, scoped, tag = 'scoped memory for tpu_custom_call.1']
    #allocation7 [shape = 'u8[131072]{0}', space=vmem, size = 0x20000, scoped, tag = 'input window, operand 2, single buffered']
    #allocation8 [shape = 'u8[2560]{0}', space=vmem, size = 0xc00, scoped, tag = 'input window, operand 3, single buffered']
    #allocation9 [shape = 's32[1]{0}', space=sflag, size = 0x4, scoped, tag = 'scoped memory for tpu_custom_call.1']
    #allocation10 [shape = 'u8[4096]{0}', space=vmem, size = 0x1000, scoped, tag = 'output window, operand 0, single buffered']
    %9 = vsyncpa [#allocation3], 0
    %10 = vsyncpa [#allocation6], 0
    %11 = vsyncpa [#allocation9], 0
    %12 = vsyncpa [#allocation4], 0
    // Predicated region
    $region2: #{tpu_custom_call.1} parent=1 // pred_check
      _
    $region3: #{tpu_custom_call.1} parent=1 // pred_check_branch
      %14 = sbr.rel (0) target = $region5
    $region4: #{tpu_custom_call.1} parent=1 // pred_region
      %16 = vsyncadd [#allocation3], 0
      %s18 = sshll.u32 %s0, 4
      %s19 = int_to_ptr.hbm [resolvable:$true] %s18
      %s20 = sshll.u32 [#allocation2], 4
      %s21 = int_to_ptr.vmem [resolvable:$true] %s20
      %23 = dma.hbm_to_vmem [thread:$0]  %s19, 64, %s21, [#allocation3]
    $region5: #{tpu_custom_call.1} parent=1 // pred_fallthru
      _
    // Predicated region
    $region6: #{tpu_custom_call.1} parent=1 // pred_check
      _
    $region7: #{tpu_custom_call.1} parent=1 // pred_check_branch
      %25 = sbr.rel (0) target = $region9
    $region8: #{tpu_custom_call.1} parent=1 // pred_region
      %27 = vsyncadd [#allocation6], 0
      %s28 = sshll.u32 %s1, 4
      %s29 = int_to_ptr.hbm [resolvable:$true] %s28
      %s30 = sshll.u32 [#allocation5], 4
      %s31 = int_to_ptr.vmem [resolvable:$true] %s30
      %36 = dma.hbm_to_vmem [thread:$0]  %s29, 1024, %s31, [#allocation6], 64, 64, 4
    $region9: #{tpu_custom_call.1} parent=1 // pred_fallthru
      _
    // Predicated region
    $region10: #{tpu_custom_call.1} parent=1 // pred_check
      _
    $region11: #{tpu_custom_call.1} parent=1 // pred_check_branch
      %38 = sbr.rel (0) target = $region13
    $region12: #{tpu_custom_call.1} parent=1 // pred_region
      %40 = vsyncadd [#allocation6], 0
      %s41 = sshll.u32 %s2, 4
      %s42 = int_to_ptr.hbm [resolvable:$true] %s41
      %s43 = sshll.u32 [#allocation7], 4
      %s44 = int_to_ptr.vmem [resolvable:$true] %s43
      %49 = dma.hbm_to_vmem [thread:$0]  %s42, 4096, %s44, [#allocation6], 64, 64, 4
    $region13: #{tpu_custom_call.1} parent=1 // pred_fallthru
      _
    // Predicated region
    $region14: #{tpu_custom_call.1} parent=1 // pred_check
      _
    $region15: #{tpu_custom_call.1} parent=1 // pred_check_branch
      %51 = sbr.rel (0) target = $region17
    $region16: #{tpu_custom_call.1} parent=1 // pred_region
      %53 = vsyncadd [#allocation9], 0
      %s54 = sshll.u32 %s3, 4
      %s55 = int_to_ptr.hbm [resolvable:$true] %s54
      %s56 = sshll.u32 [#allocation8], 4
      %s57 = int_to_ptr.vmem [resolvable:$true] %s56
      %62 = dma.hbm_to_vmem [thread:$0]  %s55, 80, %s57, [#allocation9], 16, 16, 1
    $region17: #{tpu_custom_call.1} parent=1 // pred_fallthru
      _
    // Predicated region
    $region18: #{tpu_custom_call.1} parent=1 // pred_check
      _
    $region19: #{tpu_custom_call.1} parent=1 // pred_check_branch
      %64 = sbr.rel (0) target = $region21
    $region20: #{tpu_custom_call.1} parent=1 // pred_region
      %66 = dma.done [#allocation3], 64
    $region21: #{tpu_custom_call.1} parent=1 // pred_fallthru
      _
    // Predicated region
    $region22: #{tpu_custom_call.1} parent=1 // pred_check
      _
    $region23: #{tpu_custom_call.1} parent=1 // pred_check_branch
      %68 = sbr.rel (0) target = $region25
    $region24: #{tpu_custom_call.1} parent=1 // pred_region
      %70 = dma.done [#allocation6], 1024
    $region25: #{tpu_custom_call.1} parent=1 // pred_fallthru
      _
    // Predicated region
    $region26: #{tpu_custom_call.1} parent=1 // pred_check
      _
    $region27: #{tpu_custom_call.1} parent=1 // pred_check_branch
      %72 = sbr.rel (0) target = $region29
    $region28: #{tpu_custom_call.1} parent=1 // pred_region
      %74 = dma.done [#allocation6], 4096
    $region29: #{tpu_custom_call.1} parent=1 // pred_fallthru
      _
    // Predicated region
    $region30: #{tpu_custom_call.1} parent=1 // pred_check
      _
    $region31: #{tpu_custom_call.1} parent=1 // pred_check_branch
      %76 = sbr.rel (0) target = $region33
    $region32: #{tpu_custom_call.1} parent=1 // pred_region
      %78 = dma.done [#allocation9], 80
    $region33: #{tpu_custom_call.1} parent=1 // pred_fallthru
      _
    %v79 = vld [vmem:[#allocation2] sm:$0xf]
    %v80 = vld [vmem:[#allocation5] sm:$0xf]
    %v81 = vld [vmem:[#allocation5 + $0x4] sm:$0xf]
    %v82 = vld [vmem:[#allocation5 + $0x8] sm:$0xf]
    %v83 = vld [vmem:[#allocation5 + $0xc] sm:$0xf]
    %v84 = vld [vmem:[#allocation5 + $0x10] sm:$0xf]
    %v85 = vld [vmem:[#allocation5 + $0x14] sm:$0xf]
    %v86 = vld [vmem:[#allocation5 + $0x18] sm:$0xf]
    %v87 = vld [vmem:[#allocation5 + $0x1c] sm:$0xf]
    %v88 = vld [vmem:[#allocation5 + $0x20] sm:$0xf]
    %v89 = vld [vmem:[#allocation5 + $0x24] sm:$0xf]
    %v90 = vld [vmem:[#allocation5 + $0x28] sm:$0xf]
    %v91 = vld [vmem:[#allocation5 + $0x2c] sm:$0xf]
    %v92 = vld [vmem:[#allocation5 + $0x30] sm:$0xf]
    %v93 = vld [vmem:[#allocation5 + $0x34] sm:$0xf]
    %v94 = vld [vmem:[#allocation5 + $0x38] sm:$0xf]
    %v95 = vld [vmem:[#allocation5 + $0x3c] sm:$0xf]
    %v96 = vld [vmem:[#allocation8] sm:$0x1]
    %v98 = vperm.slane %v96, 0
    %v116 = vunpack.c.l.b16 %v80
    %v117 = vunpack.c.l.b16 %v81
    %v118 = vunpack.c.l.b16 %v82
    %v119 = vunpack.c.l.b16 %v83
    %v120 = vunpack.c.l.b16 %v84
    %v121 = vunpack.c.l.b16 %v85
    %v122 = vunpack.c.l.b16 %v86
    %v123 = vunpack.c.l.b16 %v87
    %v124 = vunpack.c.l.b16 %v88
    %v125 = vunpack.c.l.b16 %v89
    %v126 = vunpack.c.l.b16 %v90
    %v127 = vunpack.c.l.b16 %v91
    %v128 = vunpack.c.l.b16 %v92
    %v129 = vunpack.c.l.b16 %v93
    %v130 = vunpack.c.l.b16 %v94
    %v131 = vunpack.c.l.b16 %v95
    %v132 = vpack.c.b16 %v117, %v116
    %v133 = vpack.c.b16 %v119, %v118
    %v134 = vpack.c.b16 %v121, %v120
    %v135 = vpack.c.b16 %v123, %v122
    %v136 = vpack.c.b16 %v125, %v124
    %v137 = vpack.c.b16 %v127, %v126
    %v138 = vpack.c.b16 %v129, %v128
    %v139 = vpack.c.b16 %v131, %v130
    %148 = vmatpush.bf16.msra.mxu0 %v139
    %149 = vmatpush.bf16.msra.mxu0 %v138
    %150 = vmatpush.bf16.msra.mxu0 %v137
    %151 = vmatpush.bf16.msra.mxu0 %v136
    %152 = vmatpush.bf16.msra.mxu0 %v135
    %153 = vmatpush.bf16.msra.mxu0 %v134
    %154 = vmatpush.bf16.msra.mxu0 %v133
    %155 = vmatpush.bf16.msra.mxu0 %v132
    %156 = vmatmul.bf16.gmra.mxu0 %v79
    %v157 = vpop.f32.mrf.mxu0
    %v158 = vadd.f32 %v98, %v157
    %v159 = vpop.f32.mrf.mxu0
    %160 = vdwg.mxu0
    %v161 = vmax.f32 %v158, 0.0
    %v162 = vpack.c.bf16 %v161, %v161
    %v163 = vld [vmem:[#allocation7] sm:$0xf]
    %v164 = vld [vmem:[#allocation7 + $0x4] sm:$0xf]
    %v165 = vld [vmem:[#allocation7 + $0x8] sm:$0xf]
    %v166 = vld [vmem:[#allocation7 + $0xc] sm:$0xf]
    %v167 = vld [vmem:[#allocation7 + $0x10] sm:$0xf]
    %v168 = vld [vmem:[#allocation7 + $0x14] sm:$0xf]
    %v169 = vld [vmem:[#allocation7 + $0x18] sm:$0xf]
    %v170 = vld [vmem:[#allocation7 + $0x1c] sm:$0xf]
    %v171 = vld [vmem:[#allocation7 + $0x20] sm:$0xf]
    %v172 = vld [vmem:[#allocation7 + $0x24] sm:$0xf]
    %v173 = vld [vmem:[#allocation7 + $0x28] sm:$0xf]
    %v174 = vld [vmem:[#allocation7 + $0x2c] sm:$0xf]
    %v175 = vld [vmem:[#allocation7 + $0x30] sm:$0xf]
    %v176 = vld [vmem:[#allocation7 + $0x34] sm:$0xf]
    %v177 = vld [vmem:[#allocation7 + $0x38] sm:$0xf]
    %v178 = vld [vmem:[#allocation7 + $0x3c] sm:$0xf]
    %s179 = scalar_lea.vmem [#allocation8], 1
    %v180 = vld [vmem:[%s179] sm:$0x1]
    %v182 = vperm.slane %v180, 0
    %v200 = vunpack.c.l.b16 %v163
    %v201 = vunpack.c.l.b16 %v164
    %v202 = vunpack.c.l.b16 %v165
    %v203 = vunpack.c.l.b16 %v166
    %v204 = vunpack.c.l.b16 %v167
    %v205 = vunpack.c.l.b16 %v168
    %v206 = vunpack.c.l.b16 %v169
    %v207 = vunpack.c.l.b16 %v170
    %v208 = vunpack.c.l.b16 %v171
    %v209 = vunpack.c.l.b16 %v172
    %v210 = vunpack.c.l.b16 %v173
    %v211 = vunpack.c.l.b16 %v174
    %v212 = vunpack.c.l.b16 %v175
    %v213 = vunpack.c.l.b16 %v176
    %v214 = vunpack.c.l.b16 %v177
    %v215 = vunpack.c.l.b16 %v178
    %v216 = vpack.c.b16 %v201, %v200
    %v217 = vpack.c.b16 %v203, %v202
    %v218 = vpack.c.b16 %v205, %v204
    %v219 = vpack.c.b16 %v207, %v206
    %v220 = vpack.c.b16 %v209, %v208
    %v221 = vpack.c.b16 %v211, %v210
    %v222 = vpack.c.b16 %v213, %v212
    %v223 = vpack.c.b16 %v215, %v214
    %232 = vmatpush.bf16.msra.mxu0 %v223
    %233 = vmatpush.bf16.msra.mxu0 %v222
    %234 = vmatpush.bf16.msra.mxu0 %v221
    %235 = vmatpush.bf16.msra.mxu0 %v220
    %236 = vmatpush.bf16.msra.mxu0 %v219
    %237 = vmatpush.bf16.msra.mxu0 %v218
    %238 = vmatpush.bf16.msra.mxu0 %v217
    %239 = vmatpush.bf16.msra.mxu0 %v216
    %240 = vmatmul.bf16.gmra.mxu0 %v162
    %v241 = vpop.f32.mrf.mxu0
    %v242 = vadd.f32 %v182, %v241
    %v243 = vpop.f32.mrf.mxu0
    %244 = vdwg.mxu0
    %v245 = vmax.f32 %v242, 0.0
    %v246 = vpack.c.bf16 %v245, %v245
    %s247 = scalar_lea.vmem [#allocation7], 64
    %v248 = vld [vmem:[%s247] sm:$0xf]
    %v249 = vld [vmem:[%s247 + $0x4] sm:$0xf]
    %v250 = vld [vmem:[%s247 + $0x8] sm:$0xf]
    %v251 = vld [vmem:[%s247 + $0xc] sm:$0xf]
    %v252 = vld [vmem:[%s247 + $0x10] sm:$0xf]
    %v253 = vld [vmem:[%s247 + $0x14] sm:$0xf]
    %v254 = vld [vmem:[%s247 + $0x18] sm:$0xf]
    %v255 = vld [vmem:[%s247 + $0x1c] sm:$0xf]
    %v256 = vld [vmem:[%s247 + $0x20] sm:$0xf]
    %v257 = vld [vmem:[%s247 + $0x24] sm:$0xf]
    %v258 = vld [vmem:[%s247 + $0x28] sm:$0xf]
    %v259 = vld [vmem:[%s247 + $0x2c] sm:$0xf]
    %v260 = vld [vmem:[%s247 + $0x30] sm:$0xf]
    %v261 = vld [vmem:[%s247 + $0x34] sm:$0xf]
    %v262 = vld [vmem:[%s247 + $0x38] sm:$0xf]
    %v263 = vld [vmem:[%s247 + $0x3c] sm:$0xf]
    %s264 = scalar_lea.vmem [#allocation8], 2
    %v265 = vld [vmem:[%s264] sm:$0x1]
    %v267 = vperm.slane %v265, 0
    %v285 = vunpack.c.l.b16 %v248
    %v286 = vunpack.c.l.b16 %v249
    %v287 = vunpack.c.l.b16 %v250
    %v288 = vunpack.c.l.b16 %v251
    %v289 = vunpack.c.l.b16 %v252
    %v290 = vunpack.c.l.b16 %v253
    %v291 = vunpack.c.l.b16 %v254
    %v292 = vunpack.c.l.b16 %v255
    %v293 = vunpack.c.l.b16 %v256
    %v294 = vunpack.c.l.b16 %v257
    %v295 = vunpack.c.l.b16 %v258
    %v296 = vunpack.c.l.b16 %v259
    %v297 = vunpack.c.l.b16 %v260
    %v298 = vunpack.c.l.b16 %v261
    %v299 = vunpack.c.l.b16 %v262
    %v300 = vunpack.c.l.b16 %v263
    %v301 = vpack.c.b16 %v286, %v285
    %v302 = vpack.c.b16 %v288, %v287
    %v303 = vpack.c.b16 %v290, %v289
    %v304 = vpack.c.b16 %v292, %v291
    %v305 = vpack.c.b16 %v294, %v293
    %v306 = vpack.c.b16 %v296, %v295
    %v307 = vpack.c.b16 %v298, %v297
    %v308 = vpack.c.b16 %v300, %v299
    %317 = vmatpush.bf16.msra.mxu0 %v308
    %318 = vmatpush.bf16.msra.mxu0 %v307
    %319 = vmatpush.bf16.msra.mxu0 %v306
    %320 = vmatpush.bf16.msra.mxu0 %v305
    %321 = vmatpush.bf16.msra.mxu0 %v304
    %322 = vmatpush.bf16.msra.mxu0 %v303
    %323 = vmatpush.bf16.msra.mxu0 %v302
    %324 = vmatpush.bf16.msra.mxu0 %v301
    %325 = vmatmul.bf16.gmra.mxu0 %v246
    %v326 = vpop.f32.mrf.mxu0
    %v327 = vadd.f32 %v267, %v326
    %v328 = vpop.f32.mrf.mxu0
    %329 = vdwg.mxu0
    %v330 = vmax.f32 %v327, 0.0
    %v331 = vpack.c.bf16 %v330, %v330
    %s332 = scalar_lea.vmem [#allocation7], 128
    %v333 = vld [vmem:[%s332] sm:$0xf]
    %v334 = vld [vmem:[%s332 + $0x4] sm:$0xf]
    %v335 = vld [vmem:[%s332 + $0x8] sm:$0xf]
    %v336 = vld [vmem:[%s332 + $0xc] sm:$0xf]
    %v337 = vld [vmem:[%s332 + $0x10] sm:$0xf]
    %v338 = vld [vmem:[%s332 + $0x14] sm:$0xf]
    %v339 = vld [vmem:[%s332 + $0x18] sm:$0xf]
    %v340 = vld [vmem:[%s332 + $0x1c] sm:$0xf]
    %v341 = vld [vmem:[%s332 + $0x20] sm:$0xf]
    %v342 = vld [vmem:[%s332 + $0x24] sm:$0xf]
    %v343 = vld [vmem:[%s332 + $0x28] sm:$0xf]
    %v344 = vld [vmem:[%s332 + $0x2c] sm:$0xf]
    %v345 = vld [vmem:[%s332 + $0x30] sm:$0xf]
    %v346 = vld [vmem:[%s332 + $0x34] sm:$0xf]
    %v347 = vld [vmem:[%s332 + $0x38] sm:$0xf]
    %v348 = vld [vmem:[%s332 + $0x3c] sm:$0xf]
    %s349 = scalar_lea.vmem [#allocation8], 3
    %v350 = vld [vmem:[%s349] sm:$0x1]
    %v352 = vperm.slane %v350, 0
    %v370 = vunpack.c.l.b16 %v333
    %v371 = vunpack.c.l.b16 %v334
    %v372 = vunpack.c.l.b16 %v335
    %v373 = vunpack.c.l.b16 %v336
    %v374 = vunpack.c.l.b16 %v337
    %v375 = vunpack.c.l.b16 %v338
    %v376 = vunpack.c.l.b16 %v339
    %v377 = vunpack.c.l.b16 %v340
    %v378 = vunpack.c.l.b16 %v341
    %v379 = vunpack.c.l.b16 %v342
    %v380 = vunpack.c.l.b16 %v343
    %v381 = vunpack.c.l.b16 %v344
    %v382 = vunpack.c.l.b16 %v345
    %v383 = vunpack.c.l.b16 %v346
    %v384 = vunpack.c.l.b16 %v347
    %v385 = vunpack.c.l.b16 %v348
    %v386 = vpack.c.b16 %v371, %v370
    %v387 = vpack.c.b16 %v373, %v372
    %v388 = vpack.c.b16 %v375, %v374
    %v389 = vpack.c.b16 %v377, %v376
    %v390 = vpack.c.b16 %v379, %v378
    %v391 = vpack.c.b16 %v381, %v380
    %v392 = vpack.c.b16 %v383, %v382
    %v393 = vpack.c.b16 %v385, %v384
    %402 = vmatpush.bf16.msra.mxu0 %v393
    %403 = vmatpush.bf16.msra.mxu0 %v392
    %404 = vmatpush.bf16.msra.mxu0 %v391
    %405 = vmatpush.bf16.msra.mxu0 %v390
    %406 = vmatpush.bf16.msra.mxu0 %v389
    %407 = vmatpush.bf16.msra.mxu0 %v388
    %408 = vmatpush.bf16.msra.mxu0 %v387
    %409 = vmatpush.bf16.msra.mxu0 %v386
    %410 = vmatmul.bf16.gmra.mxu0 %v331
    %v411 = vpop.f32.mrf.mxu0
    %v412 = vadd.f32 %v352, %v411
    %v413 = vpop.f32.mrf.mxu0
    %414 = vdwg.mxu0
    %v415 = vmax.f32 %v412, 0.0
    %v416 = vpack.c.bf16 %v415, %v415
    %s417 = scalar_lea.vmem [#allocation7], 192
    %v418 = vld [vmem:[%s417] sm:$0xf]
    %v419 = vld [vmem:[%s417 + $0x4] sm:$0xf]
    %v420 = vld [vmem:[%s417 + $0x8] sm:$0xf]
    %v421 = vld [vmem:[%s417 + $0xc] sm:$0xf]
    %v422 = vld [vmem:[%s417 + $0x10] sm:$0xf]
    %v423 = vld [vmem:[%s417 + $0x14] sm:$0xf]
    %v424 = vld [vmem:[%s417 + $0x18] sm:$0xf]
    %v425 = vld [vmem:[%s417 + $0x1c] sm:$0xf]
    %v426 = vld [vmem:[%s417 + $0x20] sm:$0xf]
    %v427 = vld [vmem:[%s417 + $0x24] sm:$0xf]
    %v428 = vld [vmem:[%s417 + $0x28] sm:$0xf]
    %v429 = vld [vmem:[%s417 + $0x2c] sm:$0xf]
    %v430 = vld [vmem:[%s417 + $0x30] sm:$0xf]
    %v431 = vld [vmem:[%s417 + $0x34] sm:$0xf]
    %v432 = vld [vmem:[%s417 + $0x38] sm:$0xf]
    %v433 = vld [vmem:[%s417 + $0x3c] sm:$0xf]
    %s434 = scalar_lea.vmem [#allocation8], 4
    %v435 = vld [vmem:[%s434] sm:$0x1]
    %v437 = vperm.slane %v435, 0
    %v455 = vunpack.c.l.b16 %v418
    %v456 = vunpack.c.l.b16 %v419
    %v457 = vunpack.c.l.b16 %v420
    %v458 = vunpack.c.l.b16 %v421
    %v459 = vunpack.c.l.b16 %v422
    %v460 = vunpack.c.l.b16 %v423
    %v461 = vunpack.c.l.b16 %v424
    %v462 = vunpack.c.l.b16 %v425
    %v463 = vunpack.c.l.b16 %v426
    %v464 = vunpack.c.l.b16 %v427
    %v465 = vunpack.c.l.b16 %v428
    %v466 = vunpack.c.l.b16 %v429
    %v467 = vunpack.c.l.b16 %v430
    %v468 = vunpack.c.l.b16 %v431
    %v469 = vunpack.c.l.b16 %v432
    %v470 = vunpack.c.l.b16 %v433
    %v471 = vpack.c.b16 %v456, %v455
    %v472 = vpack.c.b16 %v458, %v457
    %v473 = vpack.c.b16 %v460, %v459
    %v474 = vpack.c.b16 %v462, %v461
    %v475 = vpack.c.b16 %v464, %v463
    %v476 = vpack.c.b16 %v466, %v465
    %v477 = vpack.c.b16 %v468, %v467
    %v478 = vpack.c.b16 %v470, %v469
    %487 = vmatpush.bf16.msra.mxu0 %v478
    %488 = vmatpush.bf16.msra.mxu0 %v477
    %489 = vmatpush.bf16.msra.mxu0 %v476
    %490 = vmatpush.bf16.msra.mxu0 %v475
    %491 = vmatpush.bf16.msra.mxu0 %v474
    %492 = vmatpush.bf16.msra.mxu0 %v473
    %493 = vmatpush.bf16.msra.mxu0 %v472
    %494 = vmatpush.bf16.msra.mxu0 %v471
    %495 = vmatmul.bf16.gmra.mxu0 %v416
    %v496 = vpop.f32.mrf.mxu0
    %v497 = vadd.f32 %v437, %v496
    %v498 = vpop.f32.mrf.mxu0
    %499 = vdwg.mxu0
    %500 = vst [vmem:[#allocation10] sm:$0xff] %v497
    // Predicated region
    $region34: #{tpu_custom_call.1} parent=1 // pred_check
      _
    $region35: #{tpu_custom_call.1} parent=1 // pred_check_branch
      %502 = sbr.rel (0) target = $region37
    $region36: #{tpu_custom_call.1} parent=1 // pred_region
      %504 = vsyncadd [#allocation4], 0
      %s506 = sshll.u32 [#allocation10], 4
      %s507 = int_to_ptr.vmem [resolvable:$true] %s506
      %s508 = sshll.u32 %s4, 4
      %s509 = int_to_ptr.hbm [resolvable:$true] %s508
      %511 = dma.vmem_to_hbm [thread:$0]  %s507, 128, %s509, [#allocation4]
    $region37: #{tpu_custom_call.1} parent=1 // pred_fallthru
      _
    // Predicated region
    $region38: #{tpu_custom_call.1} parent=1 // pred_check
      _
    $region39: #{tpu_custom_call.1} parent=1 // pred_check_branch
      %513 = sbr.rel (0) target = $region41
    $region40: #{tpu_custom_call.1} parent=1 // pred_region
      %515 = dma.done [#allocation4], 128
    $region41: #{tpu_custom_call.1} parent=1 // pred_fallthru
      _
    %516 = vsyncpa [#allocation3], 1
    %517 = vsyncpa [#allocation6], 1
    %518 = vsyncpa [#allocation9], 1
    %519 = vsyncpa [#allocation4], 1

</llo_original>
